<compile_context>
chip_gen: v7x
topology: tpu7x:2x2x1
jax: 0.10.0
libtpu: 0.0.40
codegen_flags: <defaults>
</compile_context>

<pallas_src>
import math

import jax
import jax.numpy as jnp
from jax.experimental import pallas as pl
from jax.experimental.pallas import tpu as pltpu


_LANE = 128
_TARGET_BLOCK_BYTES = 4 * 1024 * 1024      # ~2-4 MiB per output block


def _vmem_capacity_bytes() -> int:
    try:
        return int(pltpu.get_tpu_info().vmem_capacity_bytes)
    except Exception:
        return 64 * 1024 * 1024            # conservative (v7x)


def _pick_tile(extent: int, bytes_per_unit: int, multiple: int,
               budget_bytes: int, target_bytes: int, min_tiles: int = 2) -> int:
    """Largest tile (in units of `multiple`) within VMEM budget / target size,
    keeping >= min_tiles tiles when the extent has room (megacore sharding)."""
    if extent <= multiple:
        return extent
    by_budget = max(multiple, budget_bytes // max(bytes_per_unit, 1))
    by_target = max(multiple, target_bytes // max(bytes_per_unit, 1))
    tile = min(extent, by_budget, by_target)
    if extent >= min_tiles * multiple and pl.cdiv(extent, tile) < min_tiles:
        tile = pl.cdiv(extent, min_tiles)
    tile = max(multiple, (tile // multiple) * multiple)
    return min(tile, extent)


def _make_lane_repeat_kernel(fromdim: int, todim: int, numrepeats: int):
    # Expansion axis on LANES: out[:, r*fromdim : r*fromdim+w] = x[:, :w].
    def kernel(x_ref, o_ref):
        xv = x_ref[...]
        for r in range(numrepeats):
            start = r * fromdim
            width = min(fromdim, todim - start)
            if width == fromdim:
                o_ref[:, start:start + width] = xv
            else:
                o_ref[:, start:start + width] = xv[:, :width]
    return kernel


def _make_sublane_repeat_kernel(fromdim: int, todim: int, numrepeats: int):
    # Expansion axis on SUBLANES (axis != last): same slice-store scheme.
    def kernel(x_ref, o_ref):
        xv = x_ref[...]
        for r in range(numrepeats):
            start = r * fromdim
            width = min(fromdim, todim - start)
            if width == fromdim:
                o_ref[:, start:start + width, :] = xv
            else:
                o_ref[:, start:start + width, :] = xv[:, :width, :]
    return kernel


def expand_vecs(x, fromdim: int, todim: int, axis: int):
    """Pallas implementation of ExpandVecs.forward."""
    ndim = x.ndim
    axis = axis % ndim
    assert x.shape[axis] == fromdim, "input size along `axis` must be fromdim"

    # Identity: repeat then slice back to fromdim == no-op. Skip the kernel.
    if todim == fromdim:
        return x

    dtype = x.dtype
    itemsize = jnp.dtype(dtype).itemsize
    numrepeats = pl.cdiv(todim, fromdim)   # repeat blocks actually written
    # TODO(synk): for very large numrepeats (>~1e3) switch the in-kernel static
    # unroll to a grid/loop over repeat groups to bound compile time.

    vmem_cap = _vmem_capacity_bytes()
    vmem_limit = min((vmem_cap * 3) // 4, 96 * 1024 * 1024)
    tile_budget = min(vmem_limit // 2, 32 * 1024 * 1024)   # live (2x-buffered) blocks

    if axis == ndim - 1:
        # ---- Lane-repeat path (common case, no transposes, reshape only). ----
        lead_shape = x.shape[:-1]
        R = math.prod(lead_shape) if lead_shape else 1
        x2 = x.reshape(R, fromdim)

        sub_mult = max(8, 32 // itemsize)                  # f32->8, bf16->16, i8->32
        bytes_per_row = 2 * (fromdim + todim) * itemsize   # double-buffered in + out
        tile_rows = _pick_tile(R, bytes_per_row, sub_mult,
                               tile_budget, _TARGET_BLOCK_BYTES)
        grid = (pl.cdiv(R, tile_rows),)

        out2 = pl.pallas_call(
            _make_lane_repeat_kernel(fromdim, todim, numrepeats),
            out_shape=jax.ShapeDtypeStruct((R, todim), dtype),
            grid=grid,
            in_specs=[pl.BlockSpec((tile_rows, fromdim), lambda i: (i, 0))],
            out_specs=pl.BlockSpec((tile_rows, todim), lambda i: (i, 0)),
            compiler_params=pltpu.CompilerParams(
                dimension_semantics=("parallel",),
                vmem_limit_bytes=vmem_limit),
            cost_estimate=pl.CostEstimate(
                flops=0, transcendentals=0,
                bytes_accessed=int((fromdim + todim) * R * itemsize)),
        )(x2)
        return out2.reshape(lead_shape + (todim,))

    # ---- Sublane-repeat path (axis not last; still transpose-free). ----
    pre = math.prod(x.shape[:axis]) if axis > 0 else 1
    post = math.prod(x.shape[axis + 1:])
    x3 = x.reshape(pre, fromdim, post)

    row_cost = 2 * (fromdim + todim) * itemsize            # per lane, per pre-row
    if row_cost * post <= tile_budget or post <= _LANE:
        tile_post = post
    else:
        lanes = max(_LANE, tile_budget // max(row_cost, 1))
        tile_post = max(_LANE, min(post, (lanes // _LANE) * _LANE))
    bytes_per_pre = row_cost * tile_post
    tile_pre = _pick_tile(pre, bytes_per_pre, 1, tile_budget, _TARGET_BLOCK_BYTES)
    grid = (pl.cdiv(pre, tile_pre), pl.cdiv(post, tile_post))

    out3 = pl.pallas_call(
        _make_sublane_repeat_kernel(fromdim, todim, numrepeats),
        out_shape=jax.ShapeDtypeStruct((pre, todim, post), dtype),
        grid=grid,
        in_specs=[pl.BlockSpec((tile_pre, fromdim, tile_post),
                               lambda i, j: (i, 0, j))],
        out_specs=pl.BlockSpec((tile_pre, todim, tile_post),
                               lambda i, j: (i, 0, j)),
        compiler_params=pltpu.CompilerParams(
            dimension_semantics=("parallel", "parallel"),
            vmem_limit_bytes=vmem_limit),
        cost_estimate=pl.CostEstimate(
            flops=0, transcendentals=0,
            bytes_accessed=int((fromdim + todim) * pre * post * itemsize)),
    )(x3)
    return out3.reshape(x.shape[:axis] + (todim,) + x.shape[axis + 1:])


def expand_vecs_ref(x, fromdim: int, todim: int, axis: int):
    """Pure-JAX reference mirroring the PyTorch code path."""
    numrepeats = todim // fromdim + 1
    if numrepeats > 1:
        reps = [1] * x.ndim
        reps[axis] = numrepeats
        _x = jnp.tile(x, reps)
    else:
        _x = x
    if todim != _x.shape[axis]:
        sl = [slice(None)] * x.ndim
        sl[axis] = slice(None, todim)
        _x = _x[tuple(sl)]
    return _x


if __name__ == "__main__":
    key = jax.random.PRNGKey(0)

    # Main case: (batch, seq, hidden) expanded along the last axis.
    batch, seq, fromdim, todim, axis = 2, 8, 32, 80, 2
    x = jax.random.normal(key, (batch, seq, fromdim), dtype=jnp.float32)
    out = jax.block_until_ready(expand_vecs(x, fromdim, todim, axis))
    ref = expand_vecs_ref(x, fromdim, todim, axis)
    assert out.shape == (batch, seq, todim), out.shape
    assert jnp.array_equal(out, ref), "mismatch vs reference (lane path)"

    # Last axis, todim not a multiple of fromdim nor of 8, negative axis.
    out_b = jax.block_until_ready(expand_vecs(x, 32, 84, -1))
    assert jnp.array_equal(out_b, expand_vecs_ref(x, 32, 84, 2)), "mismatch (todim=84)"

    # Identity (todim == fromdim): early return, no kernel launch.
    out_c = jax.block_until_ready(expand_vecs(x, 32, 32, 2))
    assert jnp.array_equal(out_c, expand_vecs_ref(x, 32, 32, 2)), "mismatch (identity)"

    # Exact multiple, non-last axis (sublane path).
    x1 = jax.random.normal(jax.random.PRNGKey(1), (2, 32, 8), dtype=jnp.float32)
    out1 = jax.block_until_ready(expand_vecs(x1, 32, 64, 1))
    assert jnp.array_equal(out1, expand_vecs_ref(x1, 32, 64, 1)), "mismatch (sublane exact)"

    # Non-last axis with ragged final repeat (sublane path, masked tail write).
    x1b = jax.random.normal(jax.random.PRNGKey(3), (2, 16, 8), dtype=jnp.float32)
    out1b = jax.block_until_ready(expand_vecs(x1b, 16, 40, 1))
    assert jnp.array_equal(out1b, expand_vecs_ref(x1b, 16, 40, 1)), "mismatch (sublane ragged)"

    # Unaligned fromdim on the last axis (lane path, ragged repeats).
    x2 = jax.random.normal(jax.random.PRNGKey(2), (4, 5), dtype=jnp.float32)
    out2 = jax.block_until_ready(expand_vecs(x2, 5, 12, 1))
    assert jnp.array_equal(out2, expand_vecs_ref(x2, 5, 12, 1)), "mismatch (unaligned fromdim)"

    print("KERNEL_OK")
</pallas_src>

<mosaic_0001>
module attributes {stable_mosaic.version = 11 : i64} {
  func.func @kernel(%arg0: i32, %arg1: memref<8x32xf32, #tpu.memory_space<vmem>>, %arg2: memref<8x80xf32, #tpu.memory_space<vmem>>) attributes {dimension_semantics = [#tpu.dimension_semantics<parallel>], iteration_bounds = array<i64: 2>, scalar_prefetch = 0 : i64, scratch_operands = 0 : i64, tpu.core_type = #tpu.core_type<tc>, window_params = [{transform_indices = @transform_0, window_bounds = array<i64: 8, 32>}, {transform_indices = @transform_1, window_bounds = array<i64: 8, 80>}]} {
    %c0 = arith.constant 0 : index
    %c0_0 = arith.constant 0 : index
    %0 = vector.load %arg1[%c0, %c0_0] : memref<8x32xf32, #tpu.memory_space<vmem>>, vector<8x32xf32>
    %c0_1 = arith.constant 0 : index
    %c0_2 = arith.constant 0 : index
    %1 = vector.load %arg2[%c0_1, %c0_2] : memref<8x80xf32, #tpu.memory_space<vmem>>, vector<8x32xf32>
    tpu.vector_store %arg2[%c0_1, %c0_2], %0 {strides = array<i32>} : memref<8x80xf32, #tpu.memory_space<vmem>>, vector<8x32xf32>,
    %c0_3 = arith.constant 0 : index
    %c32 = arith.constant 32 : index
    %2 = vector.load %arg2[%c0_3, %c32] : memref<8x80xf32, #tpu.memory_space<vmem>>, vector<8x32xf32>
    tpu.vector_store %arg2[%c0_3, %c32], %0 {strides = array<i32>} : memref<8x80xf32, #tpu.memory_space<vmem>>, vector<8x32xf32>,
    %3 = vector.extract_strided_slice %0 {offsets = [0, 0], sizes = [8, 16], strides = [1, 1]} : vector<8x32xf32> to vector<8x16xf32>
    %c0_4 = arith.constant 0 : index
    %c64 = arith.constant 64 : index
    %4 = vector.load %arg2[%c0_4, %c64] : memref<8x80xf32, #tpu.memory_space<vmem>>, vector<8x16xf32>
    tpu.vector_store %arg2[%c0_4, %c64], %3 {strides = array<i32>} : memref<8x80xf32, #tpu.memory_space<vmem>>, vector<8x16xf32>,
    return
  }
  func.func @transform_0(%arg0: i32) -> (i32, i32) {
    %c0_i32 = arith.constant 0 : i32
    %c0_i32_0 = arith.constant 0 : i32
    return %arg0, %c0_i32 : i32, i32
  }
  func.func @transform_1(%arg0: i32) -> (i32, i32) {
    %c0_i32 = arith.constant 0 : i32
    %c0_i32_0 = arith.constant 0 : i32
    return %arg0, %c0_i32 : i32, i32
  }
}

</mosaic_0001>

<llo_original>
// kernel: tpu_custom_call.1
$region0: #{tpu_custom_call.1}
  #allocation0 [shape = 'u32[]', space=smem, size = 0x4, offset = 0x4, fixed_abs, tag = 'smem constant byte address 0x4 - core index']
  #allocation1 [shape = 'u32[144,128]{1,0:T(1,128)}', space=vmem, size = 0x12000, scoped, tag = 'internal scratch']
  %s0 = inlined_call_operand.hbm [shape: f32[16,32], index: 0, kind: input, shape index: {}]
  %s1 = inlined_call_operand.hbm [shape: f32[16,80], index: 1, kind: output, shape index: {}]
  %s2 = sld [smem:[#allocation0]]
  $region41: #{tpu_custom_call.1} parent=0
    _
  %s4 = ssub.s32 1, %s2
  %s5 = scalar_select 0, %s4, %s2
  $region1: #{tpu_custom_call.1} parent=0
    #allocation2 [shape = 'u8[8192]{0}', space=vmem, size = 0x2000, scoped, tag = 'input window, operand 0']
    #allocation3 [shape = 's32[2]{0}', space=sflag, size = 0x8, scoped, tag = 'scoped memory for tpu_custom_call.1']
    #allocation4 [shape = 's32[2]{0}', space=sflag, size = 0x8, scoped, tag = 'scoped memory for tpu_custom_call.1']
    #allocation5 [shape = 'u8[8192]{0}', space=vmem, size = 0x2000, scoped, tag = 'output window, operand 0']
    %6 = vsyncpa [#allocation3], 0
    %s7 = scalar_lea.sflag [#allocation3], 1
    %8 = vsyncpa %s7, 0
    %9 = vsyncpa [#allocation4], 0
    %s10 = scalar_lea.sflag [#allocation4], 1
    %11 = vsyncpa %s10, 0
    loop: start=0, step=1, limit=4
    $region2: #{tpu_custom_call.1} parent=1 // loop_pre_header
      _
    $region3: #{tpu_custom_call.1} parent=1 // loop_header
      %s13 = sphi 0, %s17
      %p14 = scmp.ge.s32.totalorder %s13, 4
      %s23 = sphi 0, %s25
      %s26 = sphi 0, %s23
      %s27 = sphi 0, %s26
      %s43 = sphi 0, %s27
      %s49 = sphi 0, %s51
      %s52 = sphi 0, %s49
      %s53 = sphi 0, %s52
      %s69 = sphi 0, %s53
    $region4: #{tpu_custom_call.1} parent=1 // loop_header_branch
      %16 = sbr.rel (%p14) target = $region8
    $region5: #{tpu_custom_call.1} parent=1 // loop_body
      %s18 = ssub.s32 %s13, 1
      %s19 = ssub.s32 %s13, 2
      %s20 = sadd.s32 %s13, 1
      %s21 = ssub.s32 %s13, %s20
      %p22 = scmp.eq.s32.totalorder %s21, 0
      %s24 = sadd.s32 %s23, 1
      %s25 = scalar_select %p22, %s23, %s24
      %p28 = pneg %p22
      %p29 = scmp.eq.s32.totalorder %s13, 1
      %p30 = por %p28, %p29
      %p31 = scmp.ne.s32.totalorder %s23, %s26
      %p32 = scmp.eq.s32.totalorder %s13, 0
      %p33 = por %p31, %p32
      %p34 = scmp.ne.s32.totalorder %s23, %s26
      %p35 = scmp.eq.s32.totalorder %s18, 1
      %p36 = por %p34, %p35
      %p37 = scmp.ne.s32.totalorder %s26, %s27
      %p38 = scmp.eq.s32.totalorder %s18, 0
      %p39 = por %p37, %p38
      %p40 = scmp.ne.s32.totalorder %s26, %s27
      %p41 = scmp.eq.s32.totalorder %s19, 1
      %p42 = por %p40, %p41
      %p44 = scmp.ne.s32.totalorder %s27, %s43
      %p45 = scmp.eq.s32.totalorder %s19, 0
      %p46 = por %p44, %p45
      %s47 = ssub.s32 %s13, %s20
      %p48 = scmp.eq.s32.totalorder %s47, 0
      %s50 = sadd.s32 %s49, 1
      %s51 = scalar_select %p48, %s49, %s50
      %p54 = pneg %p48
      %p55 = scmp.eq.s32.totalorder %s13, 1
      %p56 = por %p54, %p55
      %p57 = scmp.ne.s32.totalorder %s49, %s52
      %p58 = scmp.eq.s32.totalorder %s13, 0
      %p59 = por %p57, %p58
      %p60 = scmp.ne.s32.totalorder %s49, %s52
      %p61 = scmp.eq.s32.totalorder %s18, 1
      %p62 = por %p60, %p61
      %p63 = scmp.ne.s32.totalorder %s52, %s53
      %p64 = scmp.eq.s32.totalorder %s18, 0
      %p65 = por %p63, %p64
      %p66 = scmp.ne.s32.totalorder %s52, %s53
      %p67 = scmp.eq.s32.totalorder %s19, 1
      %p68 = por %p66, %p67
      %p70 = scmp.ne.s32.totalorder %s53, %s69
      %p71 = scmp.eq.s32.totalorder %s19, 0
      %p72 = por %p70, %p71
      %p73 = scmp.le.s32.totalorder 1, %s13
      %p74 = scmp.lt.s32.totalorder %s13, 3
      %p75 = pnand %p73, %p74
      %p76 = pneg %p75
      // Predicated region
      $region9: #{tpu_custom_call.1} parent=5 // pred_check
        _
      $region10: #{tpu_custom_call.1} parent=5 // pred_check_branch
        %78 = sbr.rel (%p75) target = $region12
      $region11: #{tpu_custom_call.1} parent=5 // pred_region
        %s79 = ssub.s32 %s13, 1
      $region12: #{tpu_custom_call.1} parent=5 // pred_fallthru
        _
      %p80 = scmp.lt.s32.totalorder %s13, 2
      // Predicated region
      $region13: #{tpu_custom_call.1} parent=5 // pred_check
        %p81 = pneg %p80
      $region14: #{tpu_custom_call.1} parent=5 // pred_check_branch
        %83 = sbr.rel (%p81) target = $region16
      $region15: #{tpu_custom_call.1} parent=5 // pred_region
        // Predicated region
        $region17: #{tpu_custom_call.1} parent=15 // pred_check
          %p84 = pneg %p33
        $region18: #{tpu_custom_call.1} parent=15 // pred_check_branch
          %86 = sbr.rel (%p84) target = $region20
        $region19: #{tpu_custom_call.1} parent=15 // pred_region
          %s87 = sand.u32 %s23, 1
          %s88 = scalar_lea.sflag [#allocation3], %s87
          %s89 = sand.u32 %s23, 1
          %s90 = smul.addr %s89, 8
          %s91 = scalar_lea.vmem [#allocation2], %s90
          %s93 = ssub.s32 128, 128
          %94 = vsyncadd %s88, %s93
          %s95 = smul.addr %s13, 128
          %s96 = scalar_lea.hbm %s0, %s95
          %s98 = sshll.u32 %s91, 4
          %s99 = int_to_ptr.vmem [resolvable:$true] %s98
          %101 = dma.hbm_to_vmem [thread:$0]  %s96, 128, %s99, %s88
        $region20: #{tpu_custom_call.1} parent=15 // pred_fallthru
          _
      $region16: #{tpu_custom_call.1} parent=5 // pred_fallthru
        _
      %p102 = scmp.le.s32.totalorder 1, %s13
      %p103 = scmp.lt.s32.totalorder %s13, 3
      %p104 = pnand %p102, %p103
      %p105 = pneg %p104
      // Predicated region
      $region21: #{tpu_custom_call.1} parent=5 // pred_check
        _
      $region22: #{tpu_custom_call.1} parent=5 // pred_check_branch
        %107 = sbr.rel (%p104) target = $region24
      $region23: #{tpu_custom_call.1} parent=5 // pred_region
        %s108 = ssub.s32 %s13, 1
        %s109 = sand.u32 %s26, 1
        %s110 = scalar_lea.sflag [#allocation3], %s109
        %s111 = sand.u32 %s26, 1
        %s112 = smul.addr %s111, 8
        %s113 = scalar_lea.vmem [#allocation2], %s112
        // Predicated region
        $region25: #{tpu_custom_call.1} parent=23 // pred_check
          %p114 = pneg %p39
        $region26: #{tpu_custom_call.1} parent=23 // pred_check_branch
          %116 = sbr.rel (%p114) target = $region28
        $region27: #{tpu_custom_call.1} parent=23 // pred_region
          %117 = dma.done %s110, 128
        $region28: #{tpu_custom_call.1} parent=23 // pred_fallthru
          _
        %s118 = sand.u32 %s26, 1
        %s119 = scalar_lea.sflag [#allocation3], %s118
        %s120 = sand.u32 %s26, 1
        %s121 = smul.addr %s120, 8
        %s122 = scalar_lea.vmem [#allocation2], %s121
        %p123 = pneg %p39
        %p124 = pneg %p36
        %p125 = pneg %p65
        %p126 = pneg %p62
        %s127 = sand.u32 %s52, 1
        %s128 = scalar_lea.sflag [#allocation4], %s127
        %s129 = sand.u32 %s52, 1
        %s130 = smul.addr %s129, 8
        %s131 = scalar_lea.vmem [#allocation5], %s130
        %v132 = vld [vmem:[%s113] sm:$0xff]
        %vm133 = vcmask 261120
        %134 = vst.msk [vmem:[%s131] sm:$0xff] %vm133, %v132
        %136 = vrot.lane.b32.xlu0 %v132, 32
        %v137 = vpop.permute.xlu0 %136
        %vm139 = vcmask 523520
        %140 = vst.msk [vmem:[%s131] sm:$0xff] %vm139, %v137
        %141 = vrot.lane.b32.xlu0 %v132, 64
        %v142 = vpop.permute.xlu0 %141
        %vm144 = vcmask 654848
        %145 = vst.msk [vmem:[%s131] sm:$0xff] %vm144, %v142
        %s146 = sand.u32 %s52, 1
        %s147 = scalar_lea.sflag [#allocation4], %s146
        %s148 = sand.u32 %s52, 1
        %s149 = smul.addr %s148, 8
        %s150 = scalar_lea.vmem [#allocation5], %s149
        // Predicated region
        $region29: #{tpu_custom_call.1} parent=23 // pred_check
          %p151 = pneg %p62
        $region30: #{tpu_custom_call.1} parent=23 // pred_check_branch
          %153 = sbr.rel (%p151) target = $region32
        $region31: #{tpu_custom_call.1} parent=23 // pred_region
          %s155 = ssub.s32 128, 128
          %156 = vsyncadd %s147, %s155
          %s157 = smul.addr %s18, 128
          %s158 = scalar_lea.hbm %s1, %s157
          %s160 = sshll.u32 %s150, 4
          %s161 = int_to_ptr.vmem [resolvable:$true] %s160
          %163 = dma.vmem_to_hbm [thread:$0]  %s161, 128, %s158, %s147
        $region32: #{tpu_custom_call.1} parent=23 // pred_fallthru
          _
      $region24: #{tpu_custom_call.1} parent=5 // pred_fallthru
        _
      %p164 = scmp.le.s32.totalorder 2, %s13
      // Predicated region
      $region33: #{tpu_custom_call.1} parent=5 // pred_check
        %p165 = pneg %p164
      $region34: #{tpu_custom_call.1} parent=5 // pred_check_branch
        %167 = sbr.rel (%p165) target = $region36
      $region35: #{tpu_custom_call.1} parent=5 // pred_region
        %s168 = ssub.s32 %s13, 2
        // Predicated region
        $region37: #{tpu_custom_call.1} parent=35 // pred_check
          %p169 = pneg %p68
        $region38: #{tpu_custom_call.1} parent=35 // pred_check_branch
          %171 = sbr.rel (%p169) target = $region40
        $region39: #{tpu_custom_call.1} parent=35 // pred_region
          %s172 = sand.u32 %s53, 1
          %s173 = scalar_lea.sflag [#allocation4], %s172
          %s174 = sand.u32 %s53, 1
          %s175 = smul.addr %s174, 8
          %s176 = scalar_lea.vmem [#allocation5], %s175
          %177 = dma.done %s173, 128
        $region40: #{tpu_custom_call.1} parent=35 // pred_fallthru
          _
      $region36: #{tpu_custom_call.1} parent=5 // pred_fallthru
        _
    $region6: #{tpu_custom_call.1} parent=1 // loop_footer
      %s17 = sadd.s32 1, %s13
    $region7: #{tpu_custom_call.1} parent=1 // loop_footer_branch
      %12 = sbr.rel target = $region3
    $region8: #{tpu_custom_call.1} parent=1 // loop_exit
      _
    %178 = vsyncpa [#allocation3], 1
    %s179 = scalar_lea.sflag [#allocation3], 1
    %180 = vsyncpa %s179, 1
    %181 = vsyncpa [#allocation4], 1
    %s182 = scalar_lea.sflag [#allocation4], 1
    %183 = vsyncpa %s182, 1

</llo_original>
